<compile_context>
chip_gen: v7x
topology: tpu7x:2x2x1
jax: 0.10.0
libtpu: 0.0.40
codegen_flags: <defaults>
</compile_context>

<pallas_src>
import functools

import jax
import jax.numpy as jnp
from jax.experimental import pallas as pl
from jax.experimental.pallas import tpu as pltpu


def attention_gate_kernel(x_ref, g_ref,
                          wx_ref, bx_ref,
                          wg_ref, bg_ref,
                          wpsi_ref, bpsi_ref,
                          out_ref, *, precision=None):
    # x_ref: (Cin, T), g_ref: (Cg, T)
    # wx_ref: (Cint, Cin), wg_ref: (Cint, Cg), wpsi_ref: (Cint, 1)
    xw = jnp.dot(wx_ref[...], x_ref[...], precision=precision,
                 preferred_element_type=jnp.float32) + bx_ref[...]    # (Cint, T)
    gw = jnp.dot(wg_ref[...], g_ref[...], precision=precision,
                 preferred_element_type=jnp.float32) + bg_ref[...]    # (Cint, T)
    a = jnp.maximum(xw + gw, 0.0)                     # ReLU(W_g g + W_x x)
    # psi: output width 1 -> keep it off the MXU: VPU multiply + sublane reduce.
    psi = jnp.sum(a * wpsi_ref[...], axis=0, keepdims=True) + bpsi_ref[...]
    attn = jax.nn.sigmoid(psi)                        # (1, T)
    out_ref[...] = (xw * attn).astype(out_ref.dtype)  # W_x(x) * attn
    # NOTE: columns past HW in the last partial block are padding; every column
    # is independent and padded output columns are masked on writeback. Keep
    # this invariant if any cross-column reduction is ever added.


def _vmem_limit_and_budget():
    """Scoped-VMEM request and tile budget, derived from physical VMEM.

    v7x has only 64 MiB physical VMEM -> request ~40 MiB; 128 MiB parts
    (v5e/v6e) get 48 MiB. Tile budget is 3/4 of the request, leaving headroom
    for compiler-internal scratch.
    """
    phys = 64 * 1024 * 1024  # conservative default (v7x)
    try:
        phys = int(pltpu.get_tpu_info().vmem_capacity_bytes)
    except Exception:
        pass
    limit = min(48 * 1024 * 1024, (phys * 5) // 8)
    budget = (limit * 3) // 4
    return limit, budget


def _target_step_bytes():
    """Aim for ~6 us of HBM traffic per grid step (amortize ~0.35 us overhead)."""
    bw = 1.4e12
    try:
        kind = jax.devices()[0].device_kind.lower()
        if "v5" in kind:
            bw = 0.82e12
        elif "v6" in kind:
            bw = 1.4e12
        elif "7" in kind:
            bw = 3.2e12
    except Exception:
        pass
    step = int(bw * 6e-6)
    return max(6 * 1024 * 1024, min(16 * 1024 * 1024, step))


def _choose_spatial_tile(cols, cin, cg, cint, *, dtype_bytes,
                         vmem_budget_bytes, target_step_bytes):
    """Largest 512-aligned column tile fitting the VMEM budget.

    VMEM per column counts the sublane-padded, double-buffered x/g/out slabs
    plus the f32 intermediates (xw, gw, a) Mosaic materializes. HBM bytes per
    column (for step sizing) are the unpadded streamed slabs.
    """
    sub = (8 * 4) // dtype_bytes                      # 8 rows (f32) / 16 (bf16)
    pad = lambda c, m: -(-c // m) * m
    col_hbm = (cin + cg + cint) * dtype_bytes
    col_vmem = (2 * (pad(cin, sub) + pad(cg, sub) + pad(cint, sub)) * dtype_bytes
                + 3 * pad(cint, 8) * 4)
    max_cols = max(512, (vmem_budget_bytes // col_vmem) // 512 * 512)
    tgt_cols = max(512, (target_step_bytes // col_hbm) // 512 * 512)
    tile = min(max_cols, tgt_cols)
    if cols <= tile:
        return cols        # single full-width block (always a legal shape)
    return tile            # multiple of 512; remainder handled by cdiv grid


def attention_gate(x_nchw, g_nchw, params, *, stream_dtype=None,
                   matmul_precision=None):
    """x: (N, Cin, H, W), g: (N, Cg, H, W) -> (N, Cint, H, W) = W_x(x) * attn.

    stream_dtype: dtype used for the streamed x/g/out slabs and the MXU
      operands (e.g. jnp.bfloat16 to halve HBM traffic). None -> x.dtype.
    matmul_precision: passed to the two MXU dots (e.g. 'highest' for strict
      f32 fidelity at large channel counts; default is fine for bf16 / small C).
    """
    wx, bx, wg, bg, wpsi, bpsi = params
    N, Cin, H, W = x_nchw.shape
    Ng, Cg, Hg, Wg = g_nchw.shape
    assert (N, H, W) == (Ng, Hg, Wg)
    Cint = wx.shape[0]
    HW = H * W

    stream_dtype = x_nchw.dtype if stream_dtype is None else jnp.dtype(stream_dtype)
    dtype_bytes = jnp.dtype(stream_dtype).itemsize

    # Layout: free reshape in the common case. For small decoder levels
    # (HW < 128) the lane axis would be mostly masked, so spend one amortized
    # transpose to merge the batch into the column axis and stay lane-dense.
    merged = HW < 128 and N > 1
    if merged:
        x3 = jnp.transpose(x_nchw.reshape(N, Cin, HW), (1, 0, 2)).reshape(1, Cin, N * HW)
        g3 = jnp.transpose(g_nchw.reshape(N, Cg, HW), (1, 0, 2)).reshape(1, Cg, N * HW)
        Neff, cols = 1, N * HW
    else:
        x3 = x_nchw.reshape(N, Cin, HW)
        g3 = g_nchw.reshape(N, Cg, HW)
        Neff, cols = N, HW

    x3 = x3.astype(stream_dtype)
    g3 = g3.astype(stream_dtype)
    wx_s = wx.astype(stream_dtype)      # MXU operands match the stream dtype
    wg_s = wg.astype(stream_dtype)      # (accumulation stays f32 in-kernel)

    vmem_limit, vmem_budget = _vmem_limit_and_budget()
    thw = _choose_spatial_tile(cols, Cin, Cg, Cint, dtype_bytes=dtype_bytes,
                               vmem_budget_bytes=vmem_budget,
                               target_step_bytes=_target_step_bytes())
    n_hw = pl.cdiv(cols, thw)
    # Megacore: make sure there are >= 2 grid steps so v7x's second TC has work.
    if Neff * n_hw < 2 and cols >= 256:
        thw = max(128, (cols // 2) // 128 * 128)
        n_hw = pl.cdiv(cols, thw)

    # Advisory cost estimate: memory-bound custom call (bytes >> flops).
    bytes_accessed = int(
        x3.size * dtype_bytes + g3.size * dtype_bytes
        + Neff * Cint * cols * dtype_bytes
        + sum(int(w.size) * w.dtype.itemsize for w in (wx_s, bx, wg_s, bg, wpsi, bpsi)))
    flops = int(2 * Neff * cols * Cint * (Cin + Cg) + 7 * Neff * cols * Cint)
    cost = pl.CostEstimate(flops=flops, transcendentals=int(Neff * cols),
                           bytes_accessed=bytes_accessed)

    kernel = functools.partial(attention_gate_kernel, precision=matmul_precision)

    out3 = pl.pallas_call(
        kernel,
        out_shape=jax.ShapeDtypeStruct((Neff, Cint, cols), stream_dtype),
        grid_spec=pltpu.PrefetchScalarGridSpec(
            num_scalar_prefetch=0,
            grid=(Neff, n_hw),
            in_specs=[
                pl.BlockSpec((None, Cin, thw), lambda n, j: (n, 0, j)),  # x slab
                pl.BlockSpec((None, Cg, thw), lambda n, j: (n, 0, j)),   # g slab
                pl.BlockSpec((Cint, Cin), lambda n, j: (0, 0)),          # W_x
                pl.BlockSpec((Cint, 1), lambda n, j: (0, 0)),            # b_x
                pl.BlockSpec((Cint, Cg), lambda n, j: (0, 0)),           # W_g
                pl.BlockSpec((Cint, 1), lambda n, j: (0, 0)),            # b_g
                pl.BlockSpec((Cint, 1), lambda n, j: (0, 0)),            # W_psi
                pl.BlockSpec((1, 1), lambda n, j: (0, 0)),               # b_psi
            ],
            out_specs=pl.BlockSpec((None, Cint, thw), lambda n, j: (n, 0, j)),
        ),
        compiler_params=pltpu.CompilerParams(
            dimension_semantics=("parallel", "parallel"),
            vmem_limit_bytes=vmem_limit),
        cost_estimate=cost,
    )(x3, g3, wx_s, bx, wg_s, bg, wpsi, bpsi)

    if merged:
        out = jnp.transpose(out3.reshape(Cint, N, HW), (1, 0, 2))
        return out.reshape(N, Cint, H, W)
    return out3.reshape(N, Cint, H, W)


def init_params(key, in_channels, gating_channels, inter_channels):
    """Deterministic parameter init. Weights stored PyTorch-conv style
    (C_out, C_in); biases as (C_out, 1) columns for channels-first broadcast."""
    k = jax.random.split(key, 6)
    wx = jax.random.normal(k[0], (inter_channels, in_channels), jnp.float32) * 0.1
    bx = jax.random.normal(k[1], (inter_channels, 1), jnp.float32) * 0.1
    wg = jax.random.normal(k[2], (inter_channels, gating_channels), jnp.float32) * 0.1
    bg = jax.random.normal(k[3], (inter_channels, 1), jnp.float32) * 0.1
    wpsi = jax.random.normal(k[4], (inter_channels, 1), jnp.float32) * 0.1
    bpsi = jax.random.normal(k[5], (1, 1), jnp.float32) * 0.1
    return wx, bx, wg, bg, wpsi, bpsi


def reference(x_nchw, g_nchw, params):
    """Pure-JAX reference of the PyTorch forward (NCHW, 1x1 convs as einsum)."""
    wx, bx, wg, bg, wpsi, bpsi = params
    xw = jnp.einsum('dc,nchw->ndhw', wx, x_nchw) + bx.reshape(1, -1, 1, 1)
    gw = jnp.einsum('dc,nchw->ndhw', wg, g_nchw) + bg.reshape(1, -1, 1, 1)
    a = jnp.maximum(xw + gw, 0.0)
    psi = jnp.einsum('dc,nchw->ndhw', wpsi.T, a) + bpsi.reshape(1, 1, 1, 1)
    attn = jax.nn.sigmoid(psi)
    return xw * attn


if __name__ == "__main__":
    key = jax.random.PRNGKey(0)
    kx, kg, kp = jax.random.split(key, 3)

    N, Cin, Cg, Cint, H, W = 2, 4, 6, 8, 16, 16
    x = jax.random.normal(kx, (N, Cin, H, W), jnp.float32)
    g = jax.random.normal(kg, (N, Cg, H, W), jnp.float32)
    params = init_params(kp, Cin, Cg, Cint)
    ref = reference(x, g, params)

    # 1) Default f32 streaming path.
    out = jax.block_until_ready(attention_gate(x, g, params))
    assert out.shape == (N, Cint, H, W)
    assert jnp.allclose(out, ref, atol=1e-5, rtol=1e-5), \
        float(jnp.max(jnp.abs(out - ref)))

    # 2) bf16 streaming path (halves HBM bytes on a DMA-bound kernel).
    out_bf = jax.block_until_ready(
        attention_gate(x, g, params, stream_dtype=jnp.bfloat16))
    assert jnp.allclose(out_bf.astype(jnp.float32), ref, atol=5e-2, rtol=5e-2), \
        float(jnp.max(jnp.abs(out_bf.astype(jnp.float32) - ref)))

    # 3) Small-HW decoder level (HW < 128): batch merged into the lane axis.
    xs = jax.random.normal(kx, (N, Cin, 8, 8), jnp.float32)
    gs = jax.random.normal(kg, (N, Cg, 8, 8), jnp.float32)
    refs = reference(xs, gs, params)
    outs = jax.block_until_ready(attention_gate(xs, gs, params))
    assert outs.shape == (N, Cint, 8, 8)
    assert jnp.allclose(outs, refs, atol=1e-5, rtol=1e-5), \
        float(jnp.max(jnp.abs(outs - refs)))

    print("KERNEL_OK")
</pallas_src>

<mosaic_0001>
module attributes {stable_mosaic.version = 11 : i64} {
  func.func @attention_gate_kernel(%arg0: i32, %arg1: i32, %arg2: memref<1x4x256xf32, #tpu.memory_space<vmem>>, %arg3: memref<1x6x256xf32, #tpu.memory_space<vmem>>, %arg4: memref<8x4xf32, #tpu.memory_space<vmem>>, %arg5: memref<8x1xf32, #tpu.memory_space<vmem>>, %arg6: memref<8x6xf32, #tpu.memory_space<vmem>>, %arg7: memref<8x1xf32, #tpu.memory_space<vmem>>, %arg8: memref<8x1xf32, #tpu.memory_space<vmem>>, %arg9: memref<1x1xf32, #tpu.memory_space<vmem>>, %arg10: memref<1x8x256xf32, #tpu.memory_space<vmem>>) attributes {dimension_semantics = [#tpu.dimension_semantics<parallel>, #tpu.dimension_semantics<parallel>], iteration_bounds = array<i64: 2, 1>, scalar_prefetch = 0 : i64, scratch_operands = 0 : i64, tpu.core_type = #tpu.core_type<tc>, window_params = [{transform_indices = @transform_0, window_bounds = array<i64: 1, 4, 256>}, {transform_indices = @transform_1, window_bounds = array<i64: 1, 6, 256>}, {pipeline_mode = #tpu.pipeline_mode<synchronous>, transform_indices = @transform_2, window_bounds = array<i64: 8, 4>}, {pipeline_mode = #tpu.pipeline_mode<synchronous>, transform_indices = @transform_3, window_bounds = array<i64: 8, 1>}, {pipeline_mode = #tpu.pipeline_mode<synchronous>, transform_indices = @transform_4, window_bounds = array<i64: 8, 6>}, {pipeline_mode = #tpu.pipeline_mode<synchronous>, transform_indices = @transform_5, window_bounds = array<i64: 8, 1>}, {pipeline_mode = #tpu.pipeline_mode<synchronous>, transform_indices = @transform_6, window_bounds = array<i64: 8, 1>}, {pipeline_mode = #tpu.pipeline_mode<synchronous>, transform_indices = @transform_7, window_bounds = array<i64: 1, 1>}, {transform_indices = @transform_8, window_bounds = array<i64: 1, 8, 256>}]} {
    %c0 = arith.constant 0 : index
    %c0_0 = arith.constant 0 : index
    %0 = vector.load %arg4[%c0, %c0_0] : memref<8x4xf32, #tpu.memory_space<vmem>>, vector<8x4xf32>
    %c0_1 = arith.constant 0 : index
    %c0_2 = arith.constant 0 : index
    %c0_3 = arith.constant 0 : index
    %1 = vector.load %arg2[%c0_1, %c0_2, %c0_3] : memref<1x4x256xf32, #tpu.memory_space<vmem>>, vector<1x4x256xf32>
    %2 = vector.shape_cast %1 : vector<1x4x256xf32> to vector<4x256xf32>
    %cst = arith.constant dense<0.000000e+00> : vector<8x256xf32>
    %3 = tpu.matmul %0, %2, %cst {dimension_numbers = #tpu.dot_dimension_numbers<[1], [0], [0], [1], [0, 0, 1, 1], [], []>} : vector<8x4xf32>, vector<4x256xf32>, vector<8x256xf32> -> vector<8x256xf32>
    %c0_4 = arith.constant 0 : index
    %c0_5 = arith.constant 0 : index
    %4 = vector.load %arg5[%c0_4, %c0_5] : memref<8x1xf32, #tpu.memory_space<vmem>>, vector<8x1xf32>
    %5 = vector.broadcast %4 : vector<8x1xf32> to vector<8x256xf32>
    %6 = arith.addf %3, %5 : vector<8x256xf32>
    %c0_6 = arith.constant 0 : index
    %c0_7 = arith.constant 0 : index
    %7 = vector.load %arg6[%c0_6, %c0_7] : memref<8x6xf32, #tpu.memory_space<vmem>>, vector<8x6xf32>
    %c0_8 = arith.constant 0 : index
    %c0_9 = arith.constant 0 : index
    %c0_10 = arith.constant 0 : index
    %8 = vector.load %arg3[%c0_8, %c0_9, %c0_10] : memref<1x6x256xf32, #tpu.memory_space<vmem>>, vector<1x6x256xf32>
    %9 = vector.shape_cast %8 : vector<1x6x256xf32> to vector<6x256xf32>
    %cst_11 = arith.constant dense<0.000000e+00> : vector<8x256xf32>
    %10 = tpu.matmul %7, %9, %cst_11 {dimension_numbers = #tpu.dot_dimension_numbers<[1], [0], [0], [1], [0, 0, 1, 1], [], []>} : vector<8x6xf32>, vector<6x256xf32>, vector<8x256xf32> -> vector<8x256xf32>
    %c0_12 = arith.constant 0 : index
    %c0_13 = arith.constant 0 : index
    %11 = vector.load %arg7[%c0_12, %c0_13] : memref<8x1xf32, #tpu.memory_space<vmem>>, vector<8x1xf32>
    %12 = vector.broadcast %11 : vector<8x1xf32> to vector<8x256xf32>
    %13 = arith.addf %10, %12 : vector<8x256xf32>
    %14 = arith.addf %6, %13 : vector<8x256xf32>
    %cst_14 = arith.constant 0.000000e+00 : f32
    %15 = vector.broadcast %cst_14 : f32 to vector<8x256xf32>
    %16 = arith.maximumf %14, %15 : vector<8x256xf32>
    %c0_15 = arith.constant 0 : index
    %c0_16 = arith.constant 0 : index
    %17 = vector.load %arg8[%c0_15, %c0_16] : memref<8x1xf32, #tpu.memory_space<vmem>>, vector<8x1xf32>
    %18 = vector.broadcast %17 : vector<8x1xf32> to vector<8x256xf32>
    %19 = arith.mulf %16, %18 : vector<8x256xf32>
    %cst_17 = arith.constant dense<0.000000e+00> : vector<256xf32>
    %20 = vector.multi_reduction <add>, %19, %cst_17 [0] : vector<8x256xf32> to vector<256xf32>
    %21 = vector.shape_cast %20 : vector<256xf32> to vector<1x256xf32>
    %c0_18 = arith.constant 0 : index
    %c0_19 = arith.constant 0 : index
    %22 = vector.load %arg9[%c0_18, %c0_19] : memref<1x1xf32, #tpu.memory_space<vmem>>, vector<1x1xf32>
    %23 = vector.broadcast %22 : vector<1x1xf32> to vector<1x256xf32>
    %24 = arith.addf %21, %23 : vector<1x256xf32>
    %25 = arith.negf %24 : vector<1x256xf32>
    %26 = math.exp %25 : vector<1x256xf32>
    %cst_20 = arith.constant 1.000000e+00 : f32
    %27 = vector.broadcast %cst_20 : f32 to vector<1x256xf32>
    %28 = arith.addf %27, %26 : vector<1x256xf32>
    %29 = arith.divf %27, %28 : vector<1x256xf32>
    %30 = vector.broadcast %29 : vector<1x256xf32> to vector<8x256xf32>
    %31 = arith.mulf %6, %30 : vector<8x256xf32>
    %c0_21 = arith.constant 0 : index
    %c0_22 = arith.constant 0 : index
    %c0_23 = arith.constant 0 : index
    %32 = vector.load %arg10[%c0_21, %c0_22, %c0_23] : memref<1x8x256xf32, #tpu.memory_space<vmem>>, vector<1x8x256xf32>
    %33 = vector.shape_cast %32 : vector<1x8x256xf32> to vector<8x256xf32>
    %34 = vector.shape_cast %31 : vector<8x256xf32> to vector<1x8x256xf32>
    tpu.vector_store %arg10[%c0_21, %c0_22, %c0_23], %34 {strides = array<i32>} : memref<1x8x256xf32, #tpu.memory_space<vmem>>, vector<1x8x256xf32>,
    return
  }
  func.func @transform_0(%arg0: i32, %arg1: i32) -> (i32, i32, i32) {
    %c0_i32 = arith.constant 0 : i32
    %c0_i32_0 = arith.constant 0 : i32
    return %arg0, %c0_i32, %arg1 : i32, i32, i32
  }
  func.func @transform_1(%arg0: i32, %arg1: i32) -> (i32, i32, i32) {
    %c0_i32 = arith.constant 0 : i32
    %c0_i32_0 = arith.constant 0 : i32
    return %arg0, %c0_i32, %arg1 : i32, i32, i32
  }
  func.func @transform_2(%arg0: i32, %arg1: i32) -> (i32, i32) {
    %c0_i32 = arith.constant 0 : i32
    %c0_i32_0 = arith.constant 0 : i32
    %c0_i32_1 = arith.constant 0 : i32
    return %c0_i32, %c0_i32_0 : i32, i32
  }
  func.func @transform_3(%arg0: i32, %arg1: i32) -> (i32, i32) {
    %c0_i32 = arith.constant 0 : i32
    %c0_i32_0 = arith.constant 0 : i32
    %c0_i32_1 = arith.constant 0 : i32
    return %c0_i32, %c0_i32_0 : i32, i32
  }
  func.func @transform_4(%arg0: i32, %arg1: i32) -> (i32, i32) {
    %c0_i32 = arith.constant 0 : i32
    %c0_i32_0 = arith.constant 0 : i32
    %c0_i32_1 = arith.constant 0 : i32
    return %c0_i32, %c0_i32_0 : i32, i32
  }
  func.func @transform_5(%arg0: i32, %arg1: i32) -> (i32, i32) {
    %c0_i32 = arith.constant 0 : i32
    %c0_i32_0 = arith.constant 0 : i32
    %c0_i32_1 = arith.constant 0 : i32
    return %c0_i32, %c0_i32_0 : i32, i32
  }
  func.func @transform_6(%arg0: i32, %arg1: i32) -> (i32, i32) {
    %c0_i32 = arith.constant 0 : i32
    %c0_i32_0 = arith.constant 0 : i32
    %c0_i32_1 = arith.constant 0 : i32
    return %c0_i32, %c0_i32_0 : i32, i32
  }
  func.func @transform_7(%arg0: i32, %arg1: i32) -> (i32, i32) {
    %c0_i32 = arith.constant 0 : i32
    %c0_i32_0 = arith.constant 0 : i32
    %c0_i32_1 = arith.constant 0 : i32
    return %c0_i32, %c0_i32_0 : i32, i32
  }
  func.func @transform_8(%arg0: i32, %arg1: i32) -> (i32, i32, i32) {
    %c0_i32 = arith.constant 0 : i32
    %c0_i32_0 = arith.constant 0 : i32
    return %arg0, %c0_i32, %arg1 : i32, i32, i32
  }
}

</mosaic_0001>

<llo_original>
// kernel: tpu_custom_call.1
$region0: #{tpu_custom_call.1}
  #allocation0 [shape = 'u32[]', space=smem, size = 0x4, offset = 0x4, fixed_abs, tag = 'smem constant byte address 0x4 - core index']
  #allocation1 [shape = 'u32[144,128]{1,0:T(1,128)}', space=vmem, size = 0x12000, scoped, tag = 'internal scratch']
  #allocation2 [shape = 'f32[1,1]{1,0:T(1,128)S(1)}', space=vmem, size = 0x200, scoped, tag = 'scoped memory for tpu_custom_call.1']
  %s0 = inlined_call_operand.vmem [shape: f32[2,4,256], index: 0, kind: input, shape index: {}]
  %s1 = inlined_call_operand.vmem [shape: f32[2,6,256], index: 1, kind: input, shape index: {}]
  %s2 = inlined_call_operand.vmem [shape: f32[8,4], index: 2, kind: input, shape index: {}]
  %s3 = inlined_call_operand.vmem [shape: f32[8,1], index: 3, kind: input, shape index: {}]
  %s4 = inlined_call_operand.vmem [shape: f32[8,6], index: 4, kind: input, shape index: {}]
  %s5 = inlined_call_operand.vmem [shape: f32[8,1], index: 5, kind: input, shape index: {}]
  %s6 = inlined_call_operand.vmem [shape: f32[8,1], index: 6, kind: input, shape index: {}]
  %s7 = inlined_call_operand.<no memory space> [shape: f32[1,1], index: 7, kind: input, shape index: {}]
  %s8 = inlined_call_operand.hbm [shape: f32[2,8,256], index: 8, kind: output, shape index: {}]
  %s9 = sld [smem:[#allocation0]]
  $region65: #{tpu_custom_call.1} parent=0
    _
  %s11 = ssub.s32 1, %s9
  %s12 = scalar_select 0, %s11, %s9
  %v13 = vstv %s7
  %14 = vst [vmem:[#allocation2] sm:$0x1] %v13
  $region1: #{tpu_custom_call.1} parent=0
    #allocation3 [shape = 'u8[16384]{0}', space=vmem, size = 0x4000, scoped, tag = 'output window, operand 0']
    #allocation4 [shape = 's32[2]{0}', space=sflag, size = 0x8, scoped, tag = 'scoped memory for tpu_custom_call.1']
    %15 = vsyncpa [#allocation4], 0
    %s16 = scalar_lea.sflag [#allocation4], 1
    %17 = vsyncpa %s16, 0
    loop: start=0, step=1, limit=4
    $region2: #{tpu_custom_call.1} parent=1 // loop_pre_header
      _
    $region3: #{tpu_custom_call.1} parent=1 // loop_header
      %s19 = sphi 0, %s23
      %p20 = scmp.ge.s32.totalorder %s19, 4
      %s26 = sphi 0, %s38
      %s27 = sphi 0, %s34
      %s28 = sphi 0, %s26
      %s29 = sphi 0, %s27
      %s30 = sphi 0, %s28
      %s31 = sphi 0, %s29
      %s43 = sphi 0, %s45
      %s46 = sphi 0, %s43
      %s47 = sphi 0, %s46
      %s63 = sphi 0, %s47
      %s71 = sphi 0, %s73
      %s74 = sphi 0, %s71
      %s75 = sphi 0, %s74
      %s91 = sphi 0, %s75
      %s95 = sphi 0, %s95
      %s97 = sphi 0, %s95
      %s98 = sphi 0, %s97
      %s112 = sphi 0, %s98
      %s116 = sphi 0, %s116
      %s118 = sphi 0, %s116
      %s119 = sphi 0, %s118
      %s133 = sphi 0, %s119
      %s137 = sphi 0, %s137
      %s139 = sphi 0, %s137
      %s140 = sphi 0, %s139
      %s154 = sphi 0, %s140
      %s158 = sphi 0, %s158
      %s160 = sphi 0, %s158
      %s161 = sphi 0, %s160
      %s175 = sphi 0, %s161
      %s179 = sphi 0, %s179
      %s181 = sphi 0, %s179
      %s182 = sphi 0, %s181
      %s196 = sphi 0, %s182
      %s200 = sphi 0, %s200
      %s202 = sphi 0, %s200
      %s203 = sphi 0, %s202
      %s217 = sphi 0, %s203
      %s225 = sphi 0, %s227
      %s228 = sphi 0, %s225
      %s229 = sphi 0, %s228
      %s245 = sphi 0, %s229
    $region4: #{tpu_custom_call.1} parent=1 // loop_header_branch
      %22 = sbr.rel (%p20) target = $region8
    $region5: #{tpu_custom_call.1} parent=1 // loop_body
      %s24 = ssub.s32 %s19, 1
      %s25 = ssub.s32 %s19, 2
      %s32 = sadd.s32 1, %s27
      %p33 = scmp.ge.s32.totalorder %s32, 1
      %s34 = scalar_select %p33, 0, %s32
      %s35 = sadd.s32 1, %s26
      %s36 = scalar_select %p33, %s35, %s26
      %p37 = scmp.ge.s32.totalorder %s36, 2
      %s38 = scalar_select %p37, 0, %s36
      %s39 = ssub.s32 %s26, %s38
      %s40 = ssub.s32 %s27, %s34
      %s41 = sor.u32 %s39, %s40
      %p42 = scmp.eq.s32.totalorder %s41, 0
      %s44 = sadd.s32 %s43, 1
      %s45 = scalar_select %p42, %s43, %s44
      %p48 = pneg %p42
      %p49 = scmp.eq.s32.totalorder %s19, 1
      %p50 = por %p48, %p49
      %p51 = scmp.ne.s32.totalorder %s43, %s46
      %p52 = scmp.eq.s32.totalorder %s19, 0
      %p53 = por %p51, %p52
      %p54 = scmp.ne.s32.totalorder %s43, %s46
      %p55 = scmp.eq.s32.totalorder %s24, 1
      %p56 = por %p54, %p55
      %p57 = scmp.ne.s32.totalorder %s46, %s47
      %p58 = scmp.eq.s32.totalorder %s24, 0
      %p59 = por %p57, %p58
      %p60 = scmp.ne.s32.totalorder %s46, %s47
      %p61 = scmp.eq.s32.totalorder %s25, 1
      %p62 = por %p60, %p61
      %p64 = scmp.ne.s32.totalorder %s47, %s63
      %p65 = scmp.eq.s32.totalorder %s25, 0
      %p66 = por %p64, %p65
      %s67 = ssub.s32 %s26, %s38
      %s68 = ssub.s32 %s27, %s34
      %s69 = sor.u32 %s67, %s68
      %p70 = scmp.eq.s32.totalorder %s69, 0
      %s72 = sadd.s32 %s71, 1
      %s73 = scalar_select %p70, %s71, %s72
      %p76 = pneg %p70
      %p77 = scmp.eq.s32.totalorder %s19, 1
      %p78 = por %p76, %p77
      %p79 = scmp.ne.s32.totalorder %s71, %s74
      %p80 = scmp.eq.s32.totalorder %s19, 0
      %p81 = por %p79, %p80
      %p82 = scmp.ne.s32.totalorder %s71, %s74
      %p83 = scmp.eq.s32.totalorder %s24, 1
      %p84 = por %p82, %p83
      %p85 = scmp.ne.s32.totalorder %s74, %s75
      %p86 = scmp.eq.s32.totalorder %s24, 0
      %p87 = por %p85, %p86
      %p88 = scmp.ne.s32.totalorder %s74, %s75
      %p89 = scmp.eq.s32.totalorder %s25, 1
      %p90 = por %p88, %p89
      %p92 = scmp.ne.s32.totalorder %s75, %s91
      %p93 = scmp.eq.s32.totalorder %s25, 0
      %p94 = por %p92, %p93
      %s96 = sadd.s32 %s95, 1
      %p99 = scmp.eq.s32.totalorder %s19, 1
      %p100 = scmp.ne.s32.totalorder %s95, %s97
      %p101 = scmp.eq.s32.totalorder %s19, 0
      %p102 = por %p100, %p101
      %p103 = scmp.ne.s32.totalorder %s95, %s97
      %p104 = scmp.eq.s32.totalorder %s24, 1
      %p105 = por %p103, %p104
      %p106 = scmp.ne.s32.totalorder %s97, %s98
      %p107 = scmp.eq.s32.totalorder %s24, 0
      %p108 = por %p106, %p107
      %p109 = scmp.ne.s32.totalorder %s97, %s98
      %p110 = scmp.eq.s32.totalorder %s25, 1
      %p111 = por %p109, %p110
      %p113 = scmp.ne.s32.totalorder %s98, %s112
      %p114 = scmp.eq.s32.totalorder %s25, 0
      %p115 = por %p113, %p114
      %s117 = sadd.s32 %s116, 1
      %p120 = scmp.eq.s32.totalorder %s19, 1
      %p121 = scmp.ne.s32.totalorder %s116, %s118
      %p122 = scmp.eq.s32.totalorder %s19, 0
      %p123 = por %p121, %p122
      %p124 = scmp.ne.s32.totalorder %s116, %s118
      %p125 = scmp.eq.s32.totalorder %s24, 1
      %p126 = por %p124, %p125
      %p127 = scmp.ne.s32.totalorder %s118, %s119
      %p128 = scmp.eq.s32.totalorder %s24, 0
      %p129 = por %p127, %p128
      %p130 = scmp.ne.s32.totalorder %s118, %s119
      %p131 = scmp.eq.s32.totalorder %s25, 1
      %p132 = por %p130, %p131
      %p134 = scmp.ne.s32.totalorder %s119, %s133
      %p135 = scmp.eq.s32.totalorder %s25, 0
      %p136 = por %p134, %p135
      %s138 = sadd.s32 %s137, 1
      %p141 = scmp.eq.s32.totalorder %s19, 1
      %p142 = scmp.ne.s32.totalorder %s137, %s139
      %p143 = scmp.eq.s32.totalorder %s19, 0
      %p144 = por %p142, %p143
      %p145 = scmp.ne.s32.totalorder %s137, %s139
      %p146 = scmp.eq.s32.totalorder %s24, 1
      %p147 = por %p145, %p146
      %p148 = scmp.ne.s32.totalorder %s139, %s140
      %p149 = scmp.eq.s32.totalorder %s24, 0
      %p150 = por %p148, %p149
      %p151 = scmp.ne.s32.totalorder %s139, %s140
      %p152 = scmp.eq.s32.totalorder %s25, 1
      %p153 = por %p151, %p152
      %p155 = scmp.ne.s32.totalorder %s140, %s154
      %p156 = scmp.eq.s32.totalorder %s25, 0
      %p157 = por %p155, %p156
      %s159 = sadd.s32 %s158, 1
      %p162 = scmp.eq.s32.totalorder %s19, 1
      %p163 = scmp.ne.s32.totalorder %s158, %s160
      %p164 = scmp.eq.s32.totalorder %s19, 0
      %p165 = por %p163, %p164
      %p166 = scmp.ne.s32.totalorder %s158, %s160
      %p167 = scmp.eq.s32.totalorder %s24, 1
      %p168 = por %p166, %p167
      %p169 = scmp.ne.s32.totalorder %s160, %s161
      %p170 = scmp.eq.s32.totalorder %s24, 0
      %p171 = por %p169, %p170
      %p172 = scmp.ne.s32.totalorder %s160, %s161
      %p173 = scmp.eq.s32.totalorder %s25, 1
      %p174 = por %p172, %p173
      %p176 = scmp.ne.s32.totalorder %s161, %s175
      %p177 = scmp.eq.s32.totalorder %s25, 0
      %p178 = por %p176, %p177
      %s180 = sadd.s32 %s179, 1
      %p183 = scmp.eq.s32.totalorder %s19, 1
      %p184 = scmp.ne.s32.totalorder %s179, %s181
      %p185 = scmp.eq.s32.totalorder %s19, 0
      %p186 = por %p184, %p185
      %p187 = scmp.ne.s32.totalorder %s179, %s181
      %p188 = scmp.eq.s32.totalorder %s24, 1
      %p189 = por %p187, %p188
      %p190 = scmp.ne.s32.totalorder %s181, %s182
      %p191 = scmp.eq.s32.totalorder %s24, 0
      %p192 = por %p190, %p191
      %p193 = scmp.ne.s32.totalorder %s181, %s182
      %p194 = scmp.eq.s32.totalorder %s25, 1
      %p195 = por %p193, %p194
      %p197 = scmp.ne.s32.totalorder %s182, %s196
      %p198 = scmp.eq.s32.totalorder %s25, 0
      %p199 = por %p197, %p198
      %s201 = sadd.s32 %s200, 1
      %p204 = scmp.eq.s32.totalorder %s19, 1
      %p205 = scmp.ne.s32.totalorder %s200, %s202
      %p206 = scmp.eq.s32.totalorder %s19, 0
      %p207 = por %p205, %p206
      %p208 = scmp.ne.s32.totalorder %s200, %s202
      %p209 = scmp.eq.s32.totalorder %s24, 1
      %p210 = por %p208, %p209
      %p211 = scmp.ne.s32.totalorder %s202, %s203
      %p212 = scmp.eq.s32.totalorder %s24, 0
      %p213 = por %p211, %p212
      %p214 = scmp.ne.s32.totalorder %s202, %s203
      %p215 = scmp.eq.s32.totalorder %s25, 1
      %p216 = por %p214, %p215
      %p218 = scmp.ne.s32.totalorder %s203, %s217
      %p219 = scmp.eq.s32.totalorder %s25, 0
      %p220 = por %p218, %p219
      %s221 = ssub.s32 %s26, %s38
      %s222 = ssub.s32 %s27, %s34
      %s223 = sor.u32 %s221, %s222
      %p224 = scmp.eq.s32.totalorder %s223, 0
      %s226 = sadd.s32 %s225, 1
      %s227 = scalar_select %p224, %s225, %s226
      %p230 = pneg %p224
      %p231 = scmp.eq.s32.totalorder %s19, 1
      %p232 = por %p230, %p231
      %p233 = scmp.ne.s32.totalorder %s225, %s228
      %p234 = scmp.eq.s32.totalorder %s19, 0
      %p235 = por %p233, %p234
      %p236 = scmp.ne.s32.totalorder %s225, %s228
      %p237 = scmp.eq.s32.totalorder %s24, 1
      %p238 = por %p236, %p237
      %p239 = scmp.ne.s32.totalorder %s228, %s229
      %p240 = scmp.eq.s32.totalorder %s24, 0
      %p241 = por %p239, %p240
      %p242 = scmp.ne.s32.totalorder %s228, %s229
      %p243 = scmp.eq.s32.totalorder %s25, 1
      %p244 = por %p242, %p243
      %p246 = scmp.ne.s32.totalorder %s229, %s245
      %p247 = scmp.eq.s32.totalorder %s25, 0
      %p248 = por %p246, %p247
      %p249 = scmp.le.s32.totalorder 1, %s19
      %p250 = scmp.lt.s32.totalorder %s19, 3
      %p251 = pnand %p249, %p250
      %p252 = pneg %p251
      // Predicated region
      $region9: #{tpu_custom_call.1} parent=5 // pred_check
        _
      $region10: #{tpu_custom_call.1} parent=5 // pred_check_branch
        %254 = sbr.rel (%p251) target = $region12
      $region11: #{tpu_custom_call.1} parent=5 // pred_region
        %s255 = ssub.s32 %s19, 1
        // Predicated region
        $region13: #{tpu_custom_call.1} parent=11 // pred_check
          %p256 = pneg %p108
        $region14: #{tpu_custom_call.1} parent=11 // pred_check_branch
          %258 = sbr.rel (%p256) target = $region16
        $region15: #{tpu_custom_call.1} parent=11 // pred_region
          _
        $region16: #{tpu_custom_call.1} parent=11 // pred_fallthru
          _
        // Predicated region
        $region17: #{tpu_custom_call.1} parent=11 // pred_check
          %p259 = pneg %p129
        $region18: #{tpu_custom_call.1} parent=11 // pred_check_branch
          %261 = sbr.rel (%p259) target = $region20
        $region19: #{tpu_custom_call.1} parent=11 // pred_region
          _
        $region20: #{tpu_custom_call.1} parent=11 // pred_fallthru
          _
        // Predicated region
        $region21: #{tpu_custom_call.1} parent=11 // pred_check
          %p262 = pneg %p150
        $region22: #{tpu_custom_call.1} parent=11 // pred_check_branch
          %264 = sbr.rel (%p262) target = $region24
        $region23: #{tpu_custom_call.1} parent=11 // pred_region
          _
        $region24: #{tpu_custom_call.1} parent=11 // pred_fallthru
          _
        // Predicated region
        $region25: #{tpu_custom_call.1} parent=11 // pred_check
          %p265 = pneg %p171
        $region26: #{tpu_custom_call.1} parent=11 // pred_check_branch
          %267 = sbr.rel (%p265) target = $region28
        $region27: #{tpu_custom_call.1} parent=11 // pred_region
          _
        $region28: #{tpu_custom_call.1} parent=11 // pred_fallthru
          _
        // Predicated region
        $region29: #{tpu_custom_call.1} parent=11 // pred_check
          %p268 = pneg %p192
        $region30: #{tpu_custom_call.1} parent=11 // pred_check_branch
          %270 = sbr.rel (%p268) target = $region32
        $region31: #{tpu_custom_call.1} parent=11 // pred_region
          _
        $region32: #{tpu_custom_call.1} parent=11 // pred_fallthru
          _
        // Predicated region
        $region33: #{tpu_custom_call.1} parent=11 // pred_check
          %p271 = pneg %p213
        $region34: #{tpu_custom_call.1} parent=11 // pred_check_branch
          %273 = sbr.rel (%p271) target = $region36
        $region35: #{tpu_custom_call.1} parent=11 // pred_region
          _
        $region36: #{tpu_custom_call.1} parent=11 // pred_fallthru
          _
      $region12: #{tpu_custom_call.1} parent=5 // pred_fallthru
        _
      %p274 = scmp.lt.s32.totalorder %s19, 2
      // Predicated region
      $region37: #{tpu_custom_call.1} parent=5 // pred_check
        %p275 = pneg %p274
      $region38: #{tpu_custom_call.1} parent=5 // pred_check_branch
        %277 = sbr.rel (%p275) target = $region40
      $region39: #{tpu_custom_call.1} parent=5 // pred_region
        // Predicated region
        $region41: #{tpu_custom_call.1} parent=39 // pred_check
          %p278 = pneg %p53
        $region42: #{tpu_custom_call.1} parent=39 // pred_check_branch
          %280 = sbr.rel (%p278) target = $region44
        $region43: #{tpu_custom_call.1} parent=39 // pred_region
          %s281 = smul.u32 2, %s27
          %p282 = scmp.lt.s32.totalorder %s26, 1
          %s283 = scalar_select %p282, %s26, 1
          %p284 = scmp.lt.s32.totalorder %s281, 1
          %s285 = scalar_select %p284, %s281, 1
          %s286 = smul.addr %s283, 2
          %s287 = sadd.s32 %s285, %s286
          %s288 = smul.addr %s287, 4
          %s289 = scalar_lea.vmem %s0, %s288
          %s290 = smul.u32 2, %s27
        $region44: #{tpu_custom_call.1} parent=39 // pred_fallthru
          _
        // Predicated region
        $region45: #{tpu_custom_call.1} parent=39 // pred_check
          %p291 = pneg %p81
        $region46: #{tpu_custom_call.1} parent=39 // pred_check_branch
          %293 = sbr.rel (%p291) target = $region48
        $region47: #{tpu_custom_call.1} parent=39 // pred_region
          %s294 = smul.u32 2, %s27
          %p295 = scmp.lt.s32.totalorder %s26, 1
          %s296 = scalar_select %p295, %s26, 1
          %p297 = scmp.lt.s32.totalorder %s294, 1
          %s298 = scalar_select %p297, %s294, 1
          %s299 = smul.addr %s296, 2
          %s300 = sadd.s32 %s298, %s299
          %s301 = smul.addr %s300, 8
          %s302 = scalar_lea.vmem %s1, %s301
          %s303 = smul.u32 2, %s27
        $region48: #{tpu_custom_call.1} parent=39 // pred_fallthru
          _
      $region40: #{tpu_custom_call.1} parent=5 // pred_fallthru
        _
      %p304 = scmp.le.s32.totalorder 1, %s19
      %p305 = scmp.lt.s32.totalorder %s19, 3
      %p306 = pnand %p304, %p305
      %p307 = pneg %p306
      // Predicated region
      $region49: #{tpu_custom_call.1} parent=5 // pred_check
        _
      $region50: #{tpu_custom_call.1} parent=5 // pred_check_branch
        %309 = sbr.rel (%p306) target = $region52
      $region51: #{tpu_custom_call.1} parent=5 // pred_region
        %s310 = ssub.s32 %s19, 1
        %s311 = smul.u32 2, %s29
        %p312 = scmp.lt.s32.totalorder %s28, 1
        %s313 = scalar_select %p312, %s28, 1
        %p314 = scmp.lt.s32.totalorder %s311, 1
        %s315 = scalar_select %p314, %s311, 1
        %s316 = smul.addr %s313, 2
        %s317 = sadd.s32 %s315, %s316
        %s318 = smul.addr %s317, 4
        %s319 = scalar_lea.vmem %s0, %s318
        %p320 = pneg %p59
        %p321 = pneg %p56
        %s322 = smul.u32 2, %s29
        %p323 = scmp.lt.s32.totalorder %s28, 1
        %s324 = scalar_select %p323, %s28, 1
        %p325 = scmp.lt.s32.totalorder %s322, 1
        %s326 = scalar_select %p325, %s322, 1
        %s327 = smul.addr %s324, 2
        %s328 = sadd.s32 %s326, %s327
        %s329 = smul.addr %s328, 8
        %s330 = scalar_lea.vmem %s1, %s329
        %p331 = pneg %p87
        %p332 = pneg %p84
        %p333 = pneg %p108
        %p334 = pneg %p105
        %p335 = pneg %p129
        %p336 = pneg %p126
        %p337 = pneg %p150
        %p338 = pneg %p147
        %p339 = pneg %p171
        %p340 = pneg %p168
        %p341 = pneg %p192
        %p342 = pneg %p189
        %p343 = pneg %p213
        %p344 = pneg %p210
        %p345 = pneg %p241
        %p346 = pneg %p238
        %s347 = sand.u32 %s228, 1
        %s348 = scalar_lea.sflag [#allocation4], %s347
        %s349 = sand.u32 %s228, 1
        %s350 = smul.addr %s349, 16
        %s351 = scalar_lea.vmem [#allocation3], %s350
        %s352 = smul.u32 2, %s29
        %p353 = scmp.lt.s32.totalorder %s28, 1
        %s354 = scalar_select %p353, %s28, 1
        %p355 = scmp.lt.s32.totalorder %s352, 1
        %s356 = scalar_select %p355, %s352, 1
        %s357 = smul.addr %s354, 2
        %s358 = sadd.s32 %s356, %s357
        %s359 = smul.addr %s358, 4
        %s360 = scalar_lea.vmem %s0, %s359
        %s361 = smul.u32 2, %s29
        %s362 = smul.u32 2, %s29
        %p363 = scmp.lt.s32.totalorder %s28, 1
        %s364 = scalar_select %p363, %s28, 1
        %p365 = scmp.lt.s32.totalorder %s362, 1
        %s366 = scalar_select %p365, %s362, 1
        %s367 = smul.addr %s364, 2
        %s368 = sadd.s32 %s366, %s367
        %s369 = smul.addr %s368, 8
        %s370 = scalar_lea.vmem %s1, %s369
        %s371 = smul.u32 2, %s29
        %s372 = smul.u32 2, %s29
        %v373 = vld [vmem:[%s2] sm:$0xff]
        %v374 = vld [vmem:[%s360] sm:$0xff]
        %v375 = vld [vmem:[%s3] sm:$0xff]
        %377 = vset.pattern.permute.xlu0 0
        %378 = vperm.xlu0 %377, %v375
        %v379 = vpop.permute.xlu0 %378
        %v382 = vcombine.high %v374, %v374
        %vm383 = vcmask 31744
        %v385 = vsel %vm383, %v373, 0
        %vm387 = vcmask 1043456
        %v388 = vsel %vm387, %v374, 0
        %v390 = vsel %vm387, %v382, 0
        %392 = vmatprep.subr.mxu0 %v390
        %393 = vmatpush1.msra.mxu0 %v388
        %394 = vmatprep.subr.mxu0 0.0
        %395 = vmatpush1.msra.mxu0 0.0
        %396 = vmatprep.subr.mxu0 0.0
        %397 = vmatpush1.msra.mxu0 0.0
        %398 = vmatprep.subr.mxu0 0.0
        %399 = vmatpush1.msra.mxu0 0.0
        %400 = vmatprep.subr.mxu0 0.0
        %401 = vmatpush1.msra.mxu0 0.0
        %402 = vmatprep.subr.mxu0 0.0
        %403 = vmatpush1.msra.mxu0 0.0
        %404 = vmatprep.subr.mxu0 0.0
        %405 = vmatpush1.msra.mxu0 0.0
        %406 = vmatprep.subr.mxu0 0.0
        %407 = vmatpush1.msra.mxu0 0.0
        %408 = vmatprep.subr.mxu0 0.0
        %409 = vmatpush1.msra.mxu0 0.0
        %410 = vmatprep.subr.mxu0 0.0
        %411 = vmatpush1.msra.mxu0 0.0
        %412 = vmatprep.subr.mxu0 0.0
        %413 = vmatpush1.msra.mxu0 0.0
        %414 = vmatprep.subr.mxu0 0.0
        %415 = vmatpush1.msra.mxu0 0.0
        %416 = vmatprep.subr.mxu0 0.0
        %417 = vmatpush1.msra.mxu0 0.0
        %418 = vmatprep.subr.mxu0 0.0
        %419 = vmatpush1.msra.mxu0 0.0
        %420 = vmatprep.subr.mxu0 0.0
        %421 = vmatpush1.msra.mxu0 0.0
        %422 = vmatprep.subr.mxu0 0.0
        %423 = vmatpush1.msra.mxu0 0.0
        %424 = vmatprep.subr.mxu0 0.0
        %425 = vmatpush1.msra.mxu0 0.0
        %426 = vmatprep.subr.mxu0 0.0
        %427 = vmatpush1.msra.mxu0 0.0
        %428 = vmatprep.subr.mxu0 0.0
        %429 = vmatpush1.msra.mxu0 0.0
        %430 = vmatprep.subr.mxu0 0.0
        %431 = vmatpush1.msra.mxu0 0.0
        %432 = vmatprep.subr.mxu0 0.0
        %433 = vmatpush1.msra.mxu0 0.0
        %434 = vmatprep.subr.mxu0 0.0
        %435 = vmatpush1.msra.mxu0 0.0
        %436 = vmatprep.subr.mxu0 0.0
        %437 = vmatpush1.msra.mxu0 0.0
        %438 = vmatprep.subr.mxu0 0.0
        %439 = vmatpush1.msra.mxu0 0.0
        %440 = vmatprep.subr.mxu0 0.0
        %441 = vmatpush1.msra.mxu0 0.0
        %442 = vmatprep.subr.mxu0 0.0
        %443 = vmatpush1.msra.mxu0 0.0
        %444 = vmatprep.subr.mxu0 0.0
        %445 = vmatpush1.msra.mxu0 0.0
        %446 = vmatprep.subr.mxu0 0.0
        %447 = vmatpush1.msra.mxu0 0.0
        %448 = vmatprep.subr.mxu0 0.0
        %449 = vmatpush1.msra.mxu0 0.0
        %450 = vmatprep.subr.mxu0 0.0
        %451 = vmatpush1.msra.mxu0 0.0
        %452 = vmatprep.subr.mxu0 0.0
        %453 = vmatpush1.msra.mxu0 0.0
        %454 = vmatprep.subr.mxu0 0.0
        %455 = vmatpush1.msra.mxu0 0.0
        %456 = vmatprep.mubr.f32.mxu0 0.0
        %457 = vmatmul.mubr.f32.gmra.mrb[0].mxu0 %v385
        %v458 = vpop.f32.mrb[0].mxu0
        %v459 = vadd.f32 %v379, %v458
        %v460 = vpop.f32.mrb[0].mxu0
        %v461 = vadd.f32 %v379, %v460
        %462 = vdwg.mxu0
        %v463 = vld [vmem:[%s4] sm:$0xff]
        %v464 = vld [vmem:[%s370] sm:$0x3f]
        %v465 = vld [vmem:[%s370 + $0x8] sm:$0x3f]
        %v466 = vld [vmem:[%s5] sm:$0xff]
        %468 = vset.pattern.permute.xlu0 0
        %469 = vperm.xlu0 %468, %v466
        %v470 = vpop.permute.xlu0 %469
        %vm472 = vcmask 48128
        %v474 = vsel %vm472, %v463, 0
        %vm476 = vcmask 1045504
        %v478 = vsel %vm476, %v464, 0
        %v481 = vsel %vm476, %v465, 0
        %483 = vmatprep.subr.mxu0 %v481
        %484 = vmatpush1.msra.mxu0 %v478
        %485 = vmatprep.subr.mxu0 0.0
        %486 = vmatpush1.msra.mxu0 0.0
        %487 = vmatprep.subr.mxu0 0.0
        %488 = vmatpush1.msra.mxu0 0.0
        %489 = vmatprep.subr.mxu0 0.0
        %490 = vmatpush1.msra.mxu0 0.0
        %491 = vmatprep.subr.mxu0 0.0
        %492 = vmatpush1.msra.mxu0 0.0
        %493 = vmatprep.subr.mxu0 0.0
        %494 = vmatpush1.msra.mxu0 0.0
        %495 = vmatprep.subr.mxu0 0.0
        %496 = vmatpush1.msra.mxu0 0.0
        %497 = vmatprep.subr.mxu0 0.0
        %498 = vmatpush1.msra.mxu0 0.0
        %499 = vmatprep.subr.mxu0 0.0
        %500 = vmatpush1.msra.mxu0 0.0
        %501 = vmatprep.subr.mxu0 0.0
        %502 = vmatpush1.msra.mxu0 0.0
        %503 = vmatprep.subr.mxu0 0.0
        %504 = vmatpush1.msra.mxu0 0.0
        %505 = vmatprep.subr.mxu0 0.0
        %506 = vmatpush1.msra.mxu0 0.0
        %507 = vmatprep.subr.mxu0 0.0
        %508 = vmatpush1.msra.mxu0 0.0
        %509 = vmatprep.subr.mxu0 0.0
        %510 = vmatpush1.msra.mxu0 0.0
        %511 = vmatprep.subr.mxu0 0.0
        %512 = vmatpush1.msra.mxu0 0.0
        %513 = vmatprep.subr.mxu0 0.0
        %514 = vmatpush1.msra.mxu0 0.0
        %515 = vmatprep.subr.mxu0 0.0
        %516 = vmatpush1.msra.mxu0 0.0
        %517 = vmatprep.subr.mxu0 0.0
        %518 = vmatpush1.msra.mxu0 0.0
        %519 = vmatprep.subr.mxu0 0.0
        %520 = vmatpush1.msra.mxu0 0.0
        %521 = vmatprep.subr.mxu0 0.0
        %522 = vmatpush1.msra.mxu0 0.0
        %523 = vmatprep.subr.mxu0 0.0
        %524 = vmatpush1.msra.mxu0 0.0
        %525 = vmatprep.subr.mxu0 0.0
        %526 = vmatpush1.msra.mxu0 0.0
        %527 = vmatprep.subr.mxu0 0.0
        %528 = vmatpush1.msra.mxu0 0.0
        %529 = vmatprep.subr.mxu0 0.0
        %530 = vmatpush1.msra.mxu0 0.0
        %531 = vmatprep.subr.mxu0 0.0
        %532 = vmatpush1.msra.mxu0 0.0
        %533 = vmatprep.subr.mxu0 0.0
        %534 = vmatpush1.msra.mxu0 0.0
        %535 = vmatprep.subr.mxu0 0.0
        %536 = vmatpush1.msra.mxu0 0.0
        %537 = vmatprep.subr.mxu0 0.0
        %538 = vmatpush1.msra.mxu0 0.0
        %539 = vmatprep.subr.mxu0 0.0
        %540 = vmatpush1.msra.mxu0 0.0
        %541 = vmatprep.subr.mxu0 0.0
        %542 = vmatpush1.msra.mxu0 0.0
        %543 = vmatprep.subr.mxu0 0.0
        %544 = vmatpush1.msra.mxu0 0.0
        %545 = vmatprep.subr.mxu0 0.0
        %546 = vmatpush1.msra.mxu0 0.0
        %547 = vmatprep.mubr.f32.mxu0 0.0
        %548 = vmatmul.mubr.f32.gmra.mrb[0].mxu0 %v474
        %v549 = vpop.f32.mrb[0].mxu0
        %v550 = vadd.f32 %v470, %v549
        %v551 = vpop.f32.mrb[0].mxu0
        %v552 = vadd.f32 %v470, %v551
        %553 = vdwg.mxu0
        %v554 = vadd.f32 %v459, %v550
        %v555 = vadd.f32 %v461, %v552
        %v556 = vmax.f32 %v554, 0.0
        %v557 = vmax.f32 %v555, 0.0
        %v558 = vld [vmem:[%s6] sm:$0xff]
        %560 = vset.pattern.permute.xlu0 0
        %561 = vperm.xlu0 %560, %v558
        %v562 = vpop.permute.xlu0 %561
        %v564 = vmul.f32 %v556, %v562
        %v565 = vmul.f32 %v557, %v562
        %v566 = vrot.slane %v564, 4
        %v567 = vadd.f32 %v564, %v566
        %v568 = vrot.slane %v567, 2
        %v569 = vadd.f32 %v567, %v568
        %v570 = vrot.slane %v569, 1
        %v571 = vadd.f32 %v569, %v570
        %v572 = vrot.slane %v565, 4
        %v573 = vadd.f32 %v565, %v572
        %v574 = vrot.slane %v573, 2
        %v575 = vadd.f32 %v573, %v574
        %v576 = vrot.slane %v575, 1
        %v577 = vadd.f32 %v575, %v576
        %v578 = vld [vmem:[#allocation2] sm:$0x1]
        %580 = vset.pattern.permute.xlu0 0
        %581 = vperm.xlu0 %580, %v578
        %v582 = vpop.permute.xlu0 %581
        %v584 = vlaneseq
        %v585 = vshrl.u32 %v584, 7
        %v586 = vsub.s32 0, %v585
        %v587 = vrot.slane %v582, %v586
        %v588 = vadd.f32 %v571, %v587
        %v589 = vadd.f32 %v577, %v587
        %v590 = vxor.u32 %v588, 2147483648
        %v591 = vxor.u32 %v589, 2147483648
        %v592 = vmul.f32 %v590, 1.442695
        %v593 = vpow.pop %v592
        %v594 = vmul.f32 %v591, 1.442695
        %v595 = vpow.pop %v594
        %v596 = vadd.f32 %v593, 1.0
        %v597 = vadd.f32 %v595, 1.0
        %v598 = vrcp.pop %v596
        %v599 = vmul.f32 1.0, %v598
        %v600 = vrcp.pop %v597
        %v601 = vmul.f32 1.0, %v600
        %v602 = vmul.f32 %v459, %v599
        %v603 = vmul.f32 %v461, %v601
        %604 = vst [vmem:[%s351] sm:$0xff] %v602
        %605 = vst [vmem:[%s351 + $0x8] sm:$0xff] %v603
        %s606 = sand.u32 %s228, 1
        %s607 = scalar_lea.sflag [#allocation4], %s606
        %s608 = sand.u32 %s228, 1
        %s609 = smul.addr %s608, 16
        %s610 = scalar_lea.vmem [#allocation3], %s609
        // Predicated region
        $region53: #{tpu_custom_call.1} parent=51 // pred_check
          %p611 = pneg %p238
        $region54: #{tpu_custom_call.1} parent=51 // pred_check_branch
          %613 = sbr.rel (%p611) target = $region56
        $region55: #{tpu_custom_call.1} parent=51 // pred_region
          %s614 = smul.u32 2, %s29
          %s616 = ssub.s32 256, 256
          %617 = vsyncadd %s607, %s616
          %s618 = smul.addr %s28, 2
          %s619 = sadd.s32 %s614, %s618
          %s620 = smul.addr %s619, 128
          %s621 = scalar_lea.hbm %s8, %s620
          %s623 = sshll.u32 %s610, 4
          %s624 = int_to_ptr.vmem [resolvable:$true] %s623
          %626 = dma.vmem_to_hbm [thread:$0]  %s624, 256, %s621, %s607
        $region56: #{tpu_custom_call.1} parent=51 // pred_fallthru
          _
      $region52: #{tpu_custom_call.1} parent=5 // pred_fallthru
        _
      %p627 = scmp.le.s32.totalorder 2, %s19
      // Predicated region
      $region57: #{tpu_custom_call.1} parent=5 // pred_check
        %p628 = pneg %p627
      $region58: #{tpu_custom_call.1} parent=5 // pred_check_branch
        %630 = sbr.rel (%p628) target = $region60
      $region59: #{tpu_custom_call.1} parent=5 // pred_region
        %s631 = ssub.s32 %s19, 2
        // Predicated region
        $region61: #{tpu_custom_call.1} parent=59 // pred_check
          %p632 = pneg %p244
        $region62: #{tpu_custom_call.1} parent=59 // pred_check_branch
          %634 = sbr.rel (%p632) target = $region64
        $region63: #{tpu_custom_call.1} parent=59 // pred_region
          %s635 = sand.u32 %s229, 1
          %s636 = scalar_lea.sflag [#allocation4], %s635
          %s637 = sand.u32 %s229, 1
          %s638 = smul.addr %s637, 16
          %s639 = scalar_lea.vmem [#allocation3], %s638
          %640 = dma.done %s636, 256
        $region64: #{tpu_custom_call.1} parent=59 // pred_fallthru
          _
      $region60: #{tpu_custom_call.1} parent=5 // pred_fallthru
        _
    $region6: #{tpu_custom_call.1} parent=1 // loop_footer
      %s23 = sadd.s32 1, %s19
    $region7: #{tpu_custom_call.1} parent=1 // loop_footer_branch
      %18 = sbr.rel target = $region3
    $region8: #{tpu_custom_call.1} parent=1 // loop_exit
      _
    %641 = vsyncpa [#allocation4], 1
    %s642 = scalar_lea.sflag [#allocation4], 1
    %643 = vsyncpa %s642, 1

</llo_original>
